<compile_context>
chip_gen: v5e
topology: v5e:2x2
jax: 0.10.0
libtpu: 0.0.40
codegen_flags: <defaults>
</compile_context>

<pallas_src>
import functools

import jax
import jax.numpy as jnp
from jax.experimental import pallas as pl
from jax.experimental.pallas import tpu as pltpu


def _self_training_kernel(y_ref, yt_ref, thr_ref, packed_ref, pl_ref,
                          *, true_b, tile_b):
    i = pl.program_id(0)

    # Class-major tiles (C, TB); upcast in-kernel (inputs may arrive as bf16).
    y_t = y_ref[...].astype(jnp.float32)                           # (C, TB)
    yt_t = yt_ref[...].astype(jnp.float32)                         # (C, TB)
    thr = thr_ref[...].astype(jnp.float32)                         # (C, 1)

    num_classes = y_t.shape[0]
    cls = jax.lax.broadcasted_iota(jnp.int32, y_t.shape, 0)        # class ids

    # ---- softmax(y_target).max(dim=1): confidence + pseudo labels ----
    m_t = jnp.max(yt_t, axis=0, keepdims=True)                     # (1, TB)
    pseudo = jnp.min(jnp.where(yt_t == m_t, cls, num_classes),
                     axis=0, keepdims=True)                        # first argmax
    sum_exp_t = jnp.sum(jnp.exp(yt_t - m_t), axis=0, keepdims=True)
    confidence = pl.reciprocal(sum_exp_t)                          # exact 1/sum

    # ---- mask via precomputed per-class threshold (one-hot sublane gather) ----
    onehot = cls == pseudo                                         # (C, TB) bool
    thr_sel = jnp.sum(jnp.where(onehot, thr, 0.0), axis=0, keepdims=True)
    mask = (confidence >= thr_sel).astype(jnp.float32)             # (1, TB)

    # ---- cross_entropy(y, pseudo, reduction='none') ----
    m_y = jnp.max(y_t, axis=0, keepdims=True)
    lse = m_y + jnp.log(jnp.sum(jnp.exp(y_t - m_y), axis=0, keepdims=True))
    y_at_label = jnp.sum(jnp.where(onehot, y_t, 0.0), axis=0, keepdims=True)
    ce = lse - y_at_label                                          # (1, TB)

    # drop padded columns of a partial last tile from the loss contribution
    col = i * tile_b + jax.lax.broadcasted_iota(jnp.int32, (1, tile_b), 1)
    contrib = jnp.where(col < true_b, ce * mask, 0.0)              # (1, TB)

    # single lane-dense packed store: row0=mask, row1=confidence, row2=loss contrib
    packed_ref[0] = jnp.concatenate([mask, confidence, contrib], axis=0)
    pl_ref[0] = pseudo                                             # (1, TB) int32


def _pick_batch_tile(batch, num_classes, in_itemsize):
    """Lane-width (samples per tile) for class-major (C, tb) tiles.

    Corrected VMEM model: double-buffered native-dtype inputs + f32 temporaries,
    sized to stay well under the 32 MiB scoped-VMEM limit (v7x has only 64 MiB
    physical), while moving >= ~1-2 MiB of HBM per grid step so the kernel stays
    HBM-bound rather than per-step-overhead bound.
    """
    LANE = 128
    c_pad = max(8, -(-num_classes // 8) * 8)                 # sublane-padded classes
    per_col = (2 * 2 * c_pad * in_itemsize                   # 2 inputs x double buffer
               + 5 * c_pad * 4                               # f32 (C, tb) temporaries
               + 32)                                         # packed row outputs
    budget = 24 * 1024 * 1024                                # headroom under 32 MiB
    tb = min(budget // per_col, 16 * 1024)
    tb = max(LANE, (tb // LANE) * LANE)
    if batch > 2 * LANE:
        # keep grid >= 2 so ("parallel",) can shard batch tiles across v7x's 2 TCs
        half = -(-batch // 2)
        half = -(-half // LANE) * LANE
        tb = min(tb, half)
    if tb >= batch:
        return batch                                          # single full-batch block
    return tb


def adaptive_self_training_loss(y, y_target, classwise_acc, threshold):
    """y, y_target: (B, C) logits (any float dtype). classwise_acc: (C,)."""
    B, C = y.shape

    # Class-major layout: XLA does one swapaxes here (typically fused into the
    # producer); the kernel then needs no transpose and no lane padding.
    y_cm = jnp.swapaxes(y, 0, 1)                              # (C, B)
    yt_cm = jnp.swapaxes(y_target, 0, 1)                      # (C, B)

    acc = classwise_acc.astype(jnp.float32)
    # same operation order as the reference: threshold * (acc / (2 - acc))
    thr2d = (float(threshold) * (acc / (2.0 - acc))).reshape(C, 1)

    in_itemsize = max(jnp.dtype(y.dtype).itemsize, jnp.dtype(y_target.dtype).itemsize)
    tb = _pick_batch_tile(B, C, in_itemsize)
    grid = pl.cdiv(B, tb)

    kernel = functools.partial(_self_training_kernel, true_b=B, tile_b=tb)

    packed, pl_p = pl.pallas_call(
        kernel,
        out_shape=(
            jax.ShapeDtypeStruct((grid, 3, tb), jnp.float32),   # mask / conf / loss contrib
            jax.ShapeDtypeStruct((grid, 1, tb), jnp.int32),     # pseudo labels
        ),
        grid_spec=pltpu.PrefetchScalarGridSpec(
            num_scalar_prefetch=0,
            grid=(grid,),
            in_specs=[
                pl.BlockSpec((C, tb), lambda i: (0, i)),        # student logits (class-major)
                pl.BlockSpec((C, tb), lambda i: (0, i)),        # teacher logits (class-major)
                pl.BlockSpec((C, 1), lambda i: (0, 0)),         # per-class threshold
            ],
            out_specs=(
                pl.BlockSpec((1, 3, tb), lambda i: (i, 0, 0)),
                pl.BlockSpec((1, 1, tb), lambda i: (i, 0, 0)),
            ),
        ),
        compiler_params=pltpu.CompilerParams(
            dimension_semantics=("parallel",),                  # batch tiles independent
            vmem_limit_bytes=32 * 1024 * 1024,                  # safe on v5e/v6e/v7x
        ),
    )(y_cm, yt_cm, thr2d)

    mask = packed[:, 0, :].reshape(-1)[:B]
    conf = packed[:, 1, :].reshape(-1)[:B]
    loss = jnp.sum(packed[:, 2, :]) / B
    pseudo = pl_p.reshape(-1)[:B]
    return loss, mask, pseudo, conf


def _reference(y, y_target, classwise_acc, threshold):
    probs = jax.nn.softmax(y_target, axis=1)
    confidence = probs.max(axis=1)
    pseudo = probs.argmax(axis=1)
    acc_sel = classwise_acc[pseudo]
    mask = (confidence >= threshold * (acc_sel / (2.0 - acc_sel))).astype(jnp.float32)
    logp = jax.nn.log_softmax(y, axis=1)
    ce = -jnp.take_along_axis(logp, pseudo[:, None], axis=1)[:, 0]
    return (ce * mask).mean(), mask, pseudo, confidence


def _check(B, C, threshold, key, uniform_acc=True):
    k1, k2, k3 = jax.random.split(key, 3)
    y = jax.random.normal(k1, (B, C), dtype=jnp.float32)          # student logits
    y_target = jax.random.normal(k2, (B, C), dtype=jnp.float32)   # teacher logits
    if uniform_acc:
        classwise_acc = jnp.ones((C,), dtype=jnp.float32)         # module __init__ value
    else:
        classwise_acc = jax.random.uniform(k3, (C,), minval=0.2, maxval=1.0,
                                           dtype=jnp.float32)

    loss, mask, pseudo, conf = adaptive_self_training_loss(y, y_target,
                                                           classwise_acc, threshold)
    jax.block_until_ready((loss, mask, pseudo, conf))

    rl, rm, rp, rc = _reference(y, y_target, classwise_acc, threshold)
    assert jnp.allclose(loss, rl, atol=1e-5), (loss, rl)
    assert jnp.array_equal(mask, rm), (mask, rm)
    assert jnp.array_equal(pseudo.astype(jnp.int32), rp.astype(jnp.int32))
    assert jnp.allclose(conf, rc, atol=1e-5)


if __name__ == "__main__":
    key = jax.random.PRNGKey(0)
    k_a, k_b, k_c = jax.random.split(key, 3)

    # batch=8, num_classes=16 (matches the module's expected (B, C) logits)
    _check(B=8, C=16, threshold=0.9, key=k_a)
    # non-multiple-of-8 batch exercises the padded-last-tile masking path
    _check(B=11, C=16, threshold=0.9, key=k_b)
    # multi-tile grid + non-uniform classwise accuracy (partial last lane block)
    _check(B=300, C=10, threshold=0.9, key=k_c, uniform_acc=False)

    print("KERNEL_OK")
</pallas_src>

<mosaic_0001>
module attributes {stable_mosaic.version = 11 : i64} {
  func.func @_self_training_kernel(%arg0: i32, %arg1: memref<16x8xf32, #tpu.memory_space<vmem>>, %arg2: memref<16x8xf32, #tpu.memory_space<vmem>>, %arg3: memref<16x1xf32, #tpu.memory_space<vmem>>, %arg4: memref<1x3x8xf32, #tpu.memory_space<vmem>>, %arg5: memref<1x1x8xi32, #tpu.memory_space<vmem>>) attributes {dimension_semantics = [#tpu.dimension_semantics<parallel>], iteration_bounds = array<i64: 1>, scalar_prefetch = 0 : i64, scratch_operands = 0 : i64, tpu.core_type = #tpu.core_type<tc>, window_params = [{transform_indices = @transform_0, window_bounds = array<i64: 16, 8>}, {transform_indices = @transform_1, window_bounds = array<i64: 16, 8>}, {pipeline_mode = #tpu.pipeline_mode<synchronous>, transform_indices = @transform_2, window_bounds = array<i64: 16, 1>}, {transform_indices = @transform_3, window_bounds = array<i64: 1, 3, 8>}, {transform_indices = @transform_4, window_bounds = array<i64: 1, 1, 8>}]} {
    %c0 = arith.constant 0 : index
    %c0_0 = arith.constant 0 : index
    %0 = vector.load %arg1[%c0, %c0_0] : memref<16x8xf32, #tpu.memory_space<vmem>>, vector<16x8xf32>
    %c0_1 = arith.constant 0 : index
    %c0_2 = arith.constant 0 : index
    %1 = vector.load %arg2[%c0_1, %c0_2] : memref<16x8xf32, #tpu.memory_space<vmem>>, vector<16x8xf32>
    %c0_3 = arith.constant 0 : index
    %c0_4 = arith.constant 0 : index
    %2 = vector.load %arg3[%c0_3, %c0_4] : memref<16x1xf32, #tpu.memory_space<vmem>>, vector<16x1xf32>
    %3 = tpu.iota {dimensions = array<i32: 0>} : vector<16x8xi32>
    %cst = arith.constant dense<0xFF800000> : vector<8xf32>
    %4 = vector.multi_reduction <maximumf>, %1, %cst [0] : vector<16x8xf32> to vector<8xf32>
    %5 = vector.shape_cast %4 : vector<8xf32> to vector<1x8xf32>
    %6 = vector.broadcast %5 : vector<1x8xf32> to vector<16x8xf32>
    %7 = arith.cmpf oeq, %1, %6 : vector<16x8xf32>
    %c16_i32 = arith.constant 16 : i32
    %8 = vector.broadcast %c16_i32 : i32 to vector<16x8xi32>
    %9 = arith.select %7, %3, %8 : vector<16x8xi1>, vector<16x8xi32>
    %cst_5 = arith.constant dense<2147483647> : vector<8xi32>
    %10 = vector.multi_reduction <minsi>, %9, %cst_5 [0] : vector<16x8xi32> to vector<8xi32>
    %11 = vector.shape_cast %10 : vector<8xi32> to vector<1x8xi32>
    %12 = vector.broadcast %5 : vector<1x8xf32> to vector<16x8xf32>
    %13 = arith.subf %1, %12 : vector<16x8xf32>
    %14 = math.exp %13 : vector<16x8xf32>
    %cst_6 = arith.constant dense<0.000000e+00> : vector<8xf32>
    %15 = vector.multi_reduction <add>, %14, %cst_6 [0] : vector<16x8xf32> to vector<8xf32>
    %16 = vector.shape_cast %15 : vector<8xf32> to vector<1x8xf32>
    %17 = tpu.reciprocal %16 : vector<1x8xf32> -> vector<1x8xf32>
    %18 = vector.broadcast %11 : vector<1x8xi32> to vector<16x8xi32>
    %19 = arith.cmpi eq, %3, %18 : vector<16x8xi32>
    %cst_7 = arith.constant 0.000000e+00 : f32
    %20 = vector.shape_cast %2 : vector<16x1xf32> to vector<16x1xf32>
    %21 = vector.broadcast %20 : vector<16x1xf32> to vector<16x8xf32>
    %22 = vector.broadcast %cst_7 : f32 to vector<16x8xf32>
    %23 = arith.select %19, %21, %22 : vector<16x8xi1>, vector<16x8xf32>
    %cst_8 = arith.constant dense<0.000000e+00> : vector<8xf32>
    %24 = vector.multi_reduction <add>, %23, %cst_8 [0] : vector<16x8xf32> to vector<8xf32>
    %25 = vector.shape_cast %24 : vector<8xf32> to vector<1x8xf32>
    %26 = arith.cmpf oge, %17, %25 : vector<1x8xf32>
    %27 = arith.extui %26 : vector<1x8xi1> to vector<1x8xi32>
    %28 = arith.sitofp %27 : vector<1x8xi32> to vector<1x8xf32>
    %cst_9 = arith.constant dense<0xFF800000> : vector<8xf32>
    %29 = vector.multi_reduction <maximumf>, %0, %cst_9 [0] : vector<16x8xf32> to vector<8xf32>
    %30 = vector.shape_cast %29 : vector<8xf32> to vector<1x8xf32>
    %31 = vector.broadcast %30 : vector<1x8xf32> to vector<16x8xf32>
    %32 = arith.subf %0, %31 : vector<16x8xf32>
    %33 = math.exp %32 : vector<16x8xf32>
    %cst_10 = arith.constant dense<0.000000e+00> : vector<8xf32>
    %34 = vector.multi_reduction <add>, %33, %cst_10 [0] : vector<16x8xf32> to vector<8xf32>
    %35 = vector.shape_cast %34 : vector<8xf32> to vector<1x8xf32>
    %36 = math.log %35 : vector<1x8xf32>
    %37 = arith.addf %30, %36 : vector<1x8xf32>
    %cst_11 = arith.constant 0.000000e+00 : f32
    %38 = vector.broadcast %cst_11 : f32 to vector<16x8xf32>
    %39 = arith.select %19, %0, %38 : vector<16x8xi1>, vector<16x8xf32>
    %cst_12 = arith.constant dense<0.000000e+00> : vector<8xf32>
    %40 = vector.multi_reduction <add>, %39, %cst_12 [0] : vector<16x8xf32> to vector<8xf32>
    %41 = vector.shape_cast %40 : vector<8xf32> to vector<1x8xf32>
    %42 = arith.subf %37, %41 : vector<1x8xf32>
    %c8_i32 = arith.constant 8 : i32
    %43 = arith.muli %arg0, %c8_i32 : i32
    %44 = tpu.iota {dimensions = array<i32: 1>} : vector<1x8xi32>
    %45 = vector.broadcast %43 : i32 to vector<1x8xi32>
    %46 = arith.addi %45, %44 : vector<1x8xi32>
    %c8_i32_13 = arith.constant 8 : i32
    %47 = vector.broadcast %c8_i32_13 : i32 to vector<1x8xi32>
    %48 = arith.cmpi slt, %46, %47 : vector<1x8xi32>
    %49 = arith.mulf %42, %28 : vector<1x8xf32>
    %cst_14 = arith.constant 0.000000e+00 : f32
    %50 = vector.broadcast %cst_14 : f32 to vector<1x8xf32>
    %51 = arith.select %48, %49, %50 : vector<1x8xi1>, vector<1x8xf32>
    %52 = tpu.concatenate %28, %17, %51 in 0 : vector<1x8xf32>, vector<1x8xf32>, vector<1x8xf32> -> vector<3x8xf32>
    %c0_15 = arith.constant 0 : index
    %c0_16 = arith.constant 0 : index
    %c0_17 = arith.constant 0 : index
    %53 = vector.load %arg4[%c0_15, %c0_16, %c0_17] : memref<1x3x8xf32, #tpu.memory_space<vmem>>, vector<1x3x8xf32>
    %54 = vector.shape_cast %53 : vector<1x3x8xf32> to vector<3x8xf32>
    %55 = vector.shape_cast %52 : vector<3x8xf32> to vector<1x3x8xf32>
    tpu.vector_store %arg4[%c0_15, %c0_16, %c0_17], %55 {strides = array<i32>} : memref<1x3x8xf32, #tpu.memory_space<vmem>>, vector<1x3x8xf32>,
    %c0_18 = arith.constant 0 : index
    %c0_19 = arith.constant 0 : index
    %c0_20 = arith.constant 0 : index
    %56 = vector.load %arg5[%c0_18, %c0_19, %c0_20] : memref<1x1x8xi32, #tpu.memory_space<vmem>>, vector<1x1x8xi32>
    %57 = vector.shape_cast %56 : vector<1x1x8xi32> to vector<1x8xi32>
    %58 = vector.shape_cast %11 : vector<1x8xi32> to vector<1x1x8xi32>
    tpu.vector_store %arg5[%c0_18, %c0_19, %c0_20], %58 {strides = array<i32>} : memref<1x1x8xi32, #tpu.memory_space<vmem>>, vector<1x1x8xi32>,
    return
  }
  func.func @transform_0(%arg0: i32) -> (i32, i32) {
    %c0_i32 = arith.constant 0 : i32
    %c0_i32_0 = arith.constant 0 : i32
    return %c0_i32, %arg0 : i32, i32
  }
  func.func @transform_1(%arg0: i32) -> (i32, i32) {
    %c0_i32 = arith.constant 0 : i32
    %c0_i32_0 = arith.constant 0 : i32
    return %c0_i32, %arg0 : i32, i32
  }
  func.func @transform_2(%arg0: i32) -> (i32, i32) {
    %c0_i32 = arith.constant 0 : i32
    %c0_i32_0 = arith.constant 0 : i32
    %c0_i32_1 = arith.constant 0 : i32
    return %c0_i32, %c0_i32_0 : i32, i32
  }
  func.func @transform_3(%arg0: i32) -> (i32, i32, i32) {
    %c0_i32 = arith.constant 0 : i32
    %c0_i32_0 = arith.constant 0 : i32
    %c0_i32_1 = arith.constant 0 : i32
    return %arg0, %c0_i32, %c0_i32_0 : i32, i32, i32
  }
  func.func @transform_4(%arg0: i32) -> (i32, i32, i32) {
    %c0_i32 = arith.constant 0 : i32
    %c0_i32_0 = arith.constant 0 : i32
    %c0_i32_1 = arith.constant 0 : i32
    return %arg0, %c0_i32, %c0_i32_0 : i32, i32, i32
  }
}

</mosaic_0001>

<llo_original>
// kernel: tpu_custom_call.1
$region0: #{tpu_custom_call.1}
  #allocation0 [shape = 'u32[]', space=smem, size = 0x4, offset = 0x4, fixed_abs, tag = 'smem constant byte address 0x4 - core index']
  #allocation1 [shape = 'u32[72,128]{1,0:T(1,128)}', space=vmem, size = 0x9000, scoped, tag = 'internal scratch']
  %s0 = inlined_call_operand.vmem [shape: f32[16,8], index: 0, kind: input, shape index: {}]
  %s1 = inlined_call_operand.vmem [shape: f32[16,8], index: 1, kind: input, shape index: {}]
  %s2 = inlined_call_operand.vmem [shape: f32[16,1], index: 2, kind: input, shape index: {}]
  %s3 = inlined_call_operand.vmem [shape: f32[1,3,8], index: 3, kind: output, shape index: {0}]
  %s4 = inlined_call_operand.hbm [shape: s32[1,1,8], index: 4, kind: output, shape index: {1}]
  %5 = xla_tuple %s3, %s4
  %s6 = sld [smem:[#allocation0]]
  $region30: #{tpu_custom_call.1} parent=0
    _
  %s8 = ssub.s32 1, %s6
  %s9 = scalar_select 0, %s8, %s6
  $region1: #{tpu_custom_call.1} parent=0
    #allocation2 [shape = 'u8[512]{0}', space=vmem, size = 0x400, scoped, tag = 'output window, operand 1, single buffered']
    #allocation3 [shape = 's32[1]{0}', space=sflag, size = 0x4, scoped, tag = 'scoped memory for tpu_custom_call.1']
    %10 = vsyncpa [#allocation3], 0
    // Predicated region
    $region2: #{tpu_custom_call.1} parent=1 // pred_check
      _
    $region3: #{tpu_custom_call.1} parent=1 // pred_check_branch
      %12 = sbr.rel (0) target = $region5
    $region4: #{tpu_custom_call.1} parent=1 // pred_region
      _
    $region5: #{tpu_custom_call.1} parent=1 // pred_fallthru
      _
    // Predicated region
    $region6: #{tpu_custom_call.1} parent=1 // pred_check
      _
    $region7: #{tpu_custom_call.1} parent=1 // pred_check_branch
      %14 = sbr.rel (0) target = $region9
    $region8: #{tpu_custom_call.1} parent=1 // pred_region
      _
    $region9: #{tpu_custom_call.1} parent=1 // pred_fallthru
      _
    // Predicated region
    $region10: #{tpu_custom_call.1} parent=1 // pred_check
      _
    $region11: #{tpu_custom_call.1} parent=1 // pred_check_branch
      %16 = sbr.rel (0) target = $region13
    $region12: #{tpu_custom_call.1} parent=1 // pred_region
      _
    $region13: #{tpu_custom_call.1} parent=1 // pred_fallthru
      _
    %v17 = vld [vmem:[%s0] sm:$0xff]
    %v18 = vld [vmem:[%s0 + $0x8] sm:$0xff]
    %v19 = vld [vmem:[%s1] sm:$0xff]
    %v20 = vld [vmem:[%s1 + $0x8] sm:$0xff]
    %v21 = vld [vmem:[%s2] sm:$0xff]
    %v22 = vld [vmem:[%s2 + $0x8] sm:$0xff]
    %v23 = vlaneseq
    %v24 = vshrl.u32 %v23, 7
    %v25 = vadd.s32 %v24, 8
    %vm26 = vcmask 64512
    %v27 = vsel %vm26, %v19, -inf
    %v28 = vsel %vm26, %v20, -inf
    %v29 = vmax.f32 %v27, %v28
    %v30 = vrot.slane %v29, 4
    %v31 = vmax.f32 %v29, %v30
    %v32 = vrot.slane %v31, 2
    %v33 = vmax.f32 %v31, %v32
    %v34 = vrot.slane %v33, 1
    %v35 = vmax.f32 %v33, %v34
    %vm36 = vcmp.eq.f32.partialorder %v19, %v35
    %vm37 = vcmp.eq.f32.partialorder %v20, %v35
    %v38 = vsel %vm36, %v24, 16
    %v39 = vsel %vm37, %v25, 16
    %v40 = vsel %vm26, %v38, 2147483647
    %v41 = vsel %vm26, %v39, 2147483647
    %vm42 = vcmp.lt.s32.totalorder %v40, %v41
    %v43 = vsel %vm42, %v40, %v41
    %v44 = vrot.slane %v43, 4
    %vm45 = vcmp.lt.s32.totalorder %v43, %v44
    %v46 = vsel %vm45, %v43, %v44
    %v47 = vrot.slane %v46, 2
    %vm48 = vcmp.lt.s32.totalorder %v46, %v47
    %v49 = vsel %vm48, %v46, %v47
    %v50 = vrot.slane %v49, 1
    %vm51 = vcmp.lt.s32.totalorder %v49, %v50
    %v52 = vsel %vm51, %v49, %v50
    %v53 = vsub.f32 %v19, %v35
    %v54 = vsub.f32 %v20, %v35
    %v55 = vmul.f32 %v53, 1.442695
    %v56 = vpow.pop %v55
    %v57 = vmul.f32 %v54, 1.442695
    %v58 = vpow.pop %v57
    %v59 = vsel %vm26, %v56, 0.0
    %v60 = vsel %vm26, %v58, 0.0
    %v61 = vadd.f32 %v59, %v60
    %v62 = vrot.slane %v61, 4
    %v63 = vadd.f32 %v61, %v62
    %v64 = vrot.slane %v63, 2
    %v65 = vadd.f32 %v63, %v64
    %v66 = vrot.slane %v65, 1
    %v67 = vadd.f32 %v65, %v66
    %v68 = vrcp.pop %v67
    %v69 = vmul.f32 %v67, %v68
    %v70 = vsub.f32 1.0, %v69
    %v71 = vmul.f32 %v68, %v70
    %v72 = vadd.f32 %v68, %v71
    %vm73 = vweird.f32 %v67
    %vm74 = vweird.f32 %v68
    %vm75 = vmor %vm73, %vm74
    %v76 = vsel %vm75, %v68, %v72
    %v77 = vand.u32 2147483647, %v67
    %vm78 = vcmp.eq.f32.partialorder %v77, 8.507059e+37
    %v79 = vand.u32 %v67, 2147483648
    %v80 = vor.u32 1.1754944e-38, %v79
    %v81 = vsel %vm78, %v80, %v76
    %vm82 = vcmp.eq.s32.totalorder %v24, %v52
    %vm83 = vcmp.eq.s32.totalorder %v25, %v52
    %85 = vset.pattern.permute.xlu0 0
    %86 = vperm.xlu0 %85, %v21
    %v87 = vpop.permute.xlu0 %86
    %90 = vset.pattern.permute.xlu0 0
    %91 = vperm.xlu0 %90, %v22
    %v92 = vpop.permute.xlu0 %91
    %v94 = vsel %vm82, %v87, 0.0
    %v95 = vsel %vm83, %v92, 0.0
    %v96 = vsel %vm26, %v94, 0.0
    %v97 = vsel %vm26, %v95, 0.0
    %v98 = vadd.f32 %v96, %v97
    %v99 = vrot.slane %v98, 4
    %v100 = vadd.f32 %v98, %v99
    %v101 = vrot.slane %v100, 2
    %v102 = vadd.f32 %v100, %v101
    %v103 = vrot.slane %v102, 1
    %v104 = vadd.f32 %v102, %v103
    %vm105 = vcmp.ge.f32.partialorder %v81, %v104
    %v106 = vsel %vm105, 1, 0
    %v107 = vcvt.s32.f32 %v106
    %v108 = vsel %vm26, %v17, -inf
    %v109 = vsel %vm26, %v18, -inf
    %v110 = vmax.f32 %v108, %v109
    %v111 = vrot.slane %v110, 4
    %v112 = vmax.f32 %v110, %v111
    %v113 = vrot.slane %v112, 2
    %v114 = vmax.f32 %v112, %v113
    %v115 = vrot.slane %v114, 1
    %v116 = vmax.f32 %v114, %v115
    %v117 = vsub.f32 %v17, %v116
    %v118 = vsub.f32 %v18, %v116
    %v119 = vmul.f32 %v117, 1.442695
    %v120 = vpow.pop %v119
    %v121 = vmul.f32 %v118, 1.442695
    %v122 = vpow.pop %v121
    %v123 = vsel %vm26, %v120, 0.0
    %v124 = vsel %vm26, %v122, 0.0
    %v125 = vadd.f32 %v123, %v124
    %v126 = vrot.slane %v125, 4
    %v127 = vadd.f32 %v125, %v126
    %v128 = vrot.slane %v127, 2
    %v129 = vadd.f32 %v127, %v128
    %v130 = vrot.slane %v129, 1
    %v131 = vadd.f32 %v129, %v130
    %v132 = vlog2.pop %v131
    %v133 = vmul.f32 %v132, 0.6931472
    %v134 = vadd.f32 %v116, %v133
    %v135 = vsel %vm82, %v17, 0.0
    %v136 = vsel %vm83, %v18, 0.0
    %v137 = vsel %vm26, %v135, 0.0
    %v138 = vsel %vm26, %v136, 0.0
    %v139 = vadd.f32 %v137, %v138
    %v140 = vrot.slane %v139, 4
    %v141 = vadd.f32 %v139, %v140
    %v142 = vrot.slane %v141, 2
    %v143 = vadd.f32 %v141, %v142
    %v144 = vrot.slane %v143, 1
    %v145 = vadd.f32 %v143, %v144
    %v146 = vsub.f32 %v134, %v145
    %s147 = smul.u32 0, 8
    %v148 = vlaneseq
    %v149 = vand.u32 %v148, 127
    %v150 = vstv %s147
    %v151 = vadd.s32 %v150, %v149
    %vm152 = vcmp.lt.s32.totalorder %v151, 8
    %v153 = vmul.f32 %v146, %v107
    %v154 = vsel %vm152, %v153, 0.0
    %vm155 = vcmask 1040384
    %v156 = vsel %vm155, %v107, %v81
    %vm157 = vcmask 1041408
    %v158 = vsel %vm157, %v156, %v154
    %vm159 = vcmask 59392
    %160 = vst.msk [vmem:[%s3] sm:$0x7] %vm159, %v158
    %vm161 = vcmask 57344
    %162 = vst.msk [vmem:[#allocation2] sm:$0x1] %vm161, %v52
    // Predicated region
    $region14: #{tpu_custom_call.1} parent=1 // pred_check
      _
    $region15: #{tpu_custom_call.1} parent=1 // pred_check_branch
      %164 = sbr.rel (0) target = $region17
    $region16: #{tpu_custom_call.1} parent=1 // pred_region
      _
    $region17: #{tpu_custom_call.1} parent=1 // pred_fallthru
      _
    // Predicated region
    $region18: #{tpu_custom_call.1} parent=1 // pred_check
      _
    $region19: #{tpu_custom_call.1} parent=1 // pred_check_branch
      %166 = sbr.rel (0) target = $region21
    $region20: #{tpu_custom_call.1} parent=1 // pred_region
      %168 = vsyncadd [#allocation3], 0
      %s170 = sshll.u32 [#allocation2], 4
      %s171 = int_to_ptr.vmem [resolvable:$true] %s170
      %s172 = sshll.u32 %s4, 4
      %s173 = int_to_ptr.hbm [resolvable:$true] %s172
      %175 = dma.vmem_to_hbm [thread:$0]  %s171, 16, %s173, [#allocation3]
    $region21: #{tpu_custom_call.1} parent=1 // pred_fallthru
      _
    // Predicated region
    $region22: #{tpu_custom_call.1} parent=1 // pred_check
      _
    $region23: #{tpu_custom_call.1} parent=1 // pred_check_branch
      %177 = sbr.rel (0) target = $region25
    $region24: #{tpu_custom_call.1} parent=1 // pred_region
      _
    $region25: #{tpu_custom_call.1} parent=1 // pred_fallthru
      _
    // Predicated region
    $region26: #{tpu_custom_call.1} parent=1 // pred_check
      _
    $region27: #{tpu_custom_call.1} parent=1 // pred_check_branch
      %179 = sbr.rel (0) target = $region29
    $region28: #{tpu_custom_call.1} parent=1 // pred_region
      %181 = dma.done [#allocation3], 16
    $region29: #{tpu_custom_call.1} parent=1 // pred_fallthru
      _
    %182 = vsyncpa [#allocation3], 1

</llo_original>
